<compile_context>
chip_gen: v6e
topology: v6e:2x2x1
jax: 0.10.0
libtpu: 0.0.40
codegen_flags: <defaults>
</compile_context>

<pallas_src>
import jax
import jax.numpy as jnp
from jax.experimental import pallas as pl
from jax.experimental.pallas import tpu as pltpu


def _dot_attn_kernel(q_ref, v_ref, o_ref):
    # q_ref: (TB, D), v_ref: (TB, S, D), o_ref: (TB, S)
    q = q_ref[...].astype(jnp.float32)        # (TB, D), tiny
    v = v_ref[...]                            # native dtype: no full f32 copy

    # Batched mat-vec on the VPU: scores[b, s] = sum_d v[b, s, d] * q[b, d].
    # dtype promotion against the f32 q upcasts v per element inside the mul,
    # so the f32 accumulation happens without materializing an f32 value tile.
    scores = jnp.sum(v * q[:, None, :], axis=-1).astype(jnp.float32)   # (TB, S)

    # Numerically stable softmax over S. Exact reciprocal: only TB divides per
    # step in an HBM-bound kernel, so the approx EUP path buys nothing.
    m = jnp.max(scores, axis=-1, keepdims=True)
    e = jnp.exp(scores - m)
    denom = jnp.sum(e, axis=-1, keepdims=True)
    o_ref[...] = (e * (1.0 / denom)).astype(o_ref.dtype)


def _physical_vmem_bytes():
    try:
        return int(pltpu.get_tpu_info().vmem_capacity_bytes)
    except Exception:
        return 64 << 20   # conservative default: v7x has the smallest VMEM


def _footprint_bytes(tb, S, D, v_isz, q_isz, o_isz):
    """Estimated per-call VMEM footprint for the chosen tile height."""
    value_tile = tb * S * D * v_isz
    q_tile = tb * D * q_isz
    out_tile = tb * S * o_isz
    # 2x for double-buffered DMA windows, plus worst-case in-kernel temps:
    # one f32 (tb,S,D) product (if Mosaic materializes the mul before the
    # reduce) and a few f32 (tb,S) score/exp buffers.
    return (2 * value_tile + 2 * q_tile + 2 * out_tile
            + tb * S * D * 4 + 4 * tb * S * 4)


def _choose_tb(B, S, D, v_isz, q_isz, o_isz, budget_bytes):
    """Batch rows per grid step: ~4 MiB value tiles within the VMEM budget."""
    target_value_bytes = 4 << 20          # amortizes ~0.35 us/step to <5% even
    row_value = max(1, S * D * v_isz)     # at v7x's 3.2 TB/s HBM
    per_row = max(1, _footprint_bytes(1, S, D, v_isz, q_isz, o_isz))
    tb = min(max(1, target_value_bytes // row_value),
             max(1, budget_bytes // per_row))
    tb = int(min(tb, B))
    if tb < B:
        # Partial-batch blocks: keep the second-to-last dim of the (tb, D) /
        # (tb, S) blocks aligned to the dtype's sublane packing.
        pack = 8 * max(1, 4 // max(o_isz, 1))   # 8 f32, 16 bf16, 32 int8/fp8
        if tb >= pack:
            tb -= tb % pack
        elif tb >= 8:
            tb -= tb % 8
    return max(1, tb)


def dot_product_attention(query, value, mask=None):
    """query: (B, D), value: (B, S, D)  ->  softmax(bmm(value, q), -1): (B, S)."""
    if mask is not None:
        # TODO(synk): masked_softmax is not defined in the provided module
        # source; refuse rather than silently returning unmasked scores.
        raise NotImplementedError("mask is not supported by this Pallas kernel")

    B, D = query.shape
    Bv, S, Dv = value.shape
    assert Bv == B and Dv == D

    v_isz = jnp.dtype(value.dtype).itemsize
    q_isz = jnp.dtype(query.dtype).itemsize
    o_isz = q_isz

    physical = _physical_vmem_bytes()
    budget = min(physical // 2, 48 << 20)   # 32 MiB on v7x, 48 MiB on v5e/v6e

    tb = _choose_tb(B, S, D, v_isz, q_isz, o_isz, budget)
    grid = (pl.cdiv(B, tb),)

    footprint = _footprint_bytes(tb, S, D, v_isz, q_isz, o_isz)
    vmem_limit = int(min(max(footprint + (8 << 20), 32 << 20),
                         physical * 3 // 4))

    cost = pl.CostEstimate(
        flops=2 * B * S * D,
        transcendentals=B * S,
        bytes_accessed=B * S * D * v_isz + B * D * q_isz + B * S * o_isz,
    )

    # TODO(synk): when a single row's (1, S, D) tile exceeds the VMEM budget
    # (very long S*D), add an "arbitrary" grid axis over S with online-softmax
    # scratch; not needed at these shapes.
    # TODO(synk): on v7x with D < 128, a producer-side (B, D, S) layout (S on
    # lanes) would fix lane occupancy of the mat-vec; a standalone HBM
    # transpose would cost more than it saves, so it is not done here.
    return pl.pallas_call(
        _dot_attn_kernel,
        out_shape=jax.ShapeDtypeStruct((B, S), query.dtype),
        grid_spec=pltpu.PrefetchScalarGridSpec(
            num_scalar_prefetch=0,
            grid=grid,
            in_specs=[
                pl.BlockSpec((tb, D), lambda i: (i, 0)),
                pl.BlockSpec((tb, S, D), lambda i: (i, 0, 0)),
            ],
            out_specs=pl.BlockSpec((tb, S), lambda i: (i, 0)),
        ),
        compiler_params=pltpu.CompilerParams(
            dimension_semantics=("parallel",),
            vmem_limit_bytes=vmem_limit,
        ),
        cost_estimate=cost,
    )(query, value)


def _reference(query, value):
    scores = jnp.einsum("bsd,bd->bs", value.astype(jnp.float32),
                        query.astype(jnp.float32))
    return jax.nn.softmax(scores, axis=-1)


if __name__ == "__main__":
    # 1) small shapes consistent with the forward: B=2, S=8, D=32 (single block)
    kq, kv = jax.random.split(jax.random.PRNGKey(0))
    B, S, D = 2, 8, 32
    query = jax.random.normal(kq, (B, D), dtype=jnp.float32)
    value = jax.random.normal(kv, (B, S, D), dtype=jnp.float32)
    out = jax.block_until_ready(dot_product_attention(query, value))
    ref = _reference(query, value)
    assert out.shape == (B, S)
    assert jnp.allclose(out, ref, atol=1e-5, rtol=1e-5)

    # 2) multi-step grid with an uneven last batch block
    kq2, kv2 = jax.random.split(jax.random.PRNGKey(1))
    B2, S2, D2 = 200, 512, 64
    q2 = jax.random.normal(kq2, (B2, D2), dtype=jnp.float32)
    v2 = jax.random.normal(kv2, (B2, S2, D2), dtype=jnp.float32)
    out2 = jax.block_until_ready(dot_product_attention(q2, v2))
    ref2 = _reference(q2, v2)
    assert out2.shape == (B2, S2)
    assert jnp.allclose(out2, ref2, atol=1e-5, rtol=1e-5)

    # 3) bf16 inputs: native-dtype DMA, per-element upcast inside the kernel
    kq3, kv3 = jax.random.split(jax.random.PRNGKey(2))
    B3, S3, D3 = 16, 128, 32
    q3 = jax.random.normal(kq3, (B3, D3), dtype=jnp.bfloat16)
    v3 = jax.random.normal(kv3, (B3, S3, D3), dtype=jnp.bfloat16)
    out3 = jax.block_until_ready(dot_product_attention(q3, v3))
    ref3 = _reference(q3, v3)
    assert out3.shape == (B3, S3)
    assert jnp.allclose(out3.astype(jnp.float32), ref3, atol=2e-2, rtol=2e-2)

    print("KERNEL_OK")
</pallas_src>

<mosaic_0001>
module attributes {stable_mosaic.version = 11 : i64} {
  func.func @_dot_attn_kernel(%arg0: i32, %arg1: memref<2x32xf32, #tpu.memory_space<vmem>>, %arg2: memref<2x8x32xf32, #tpu.memory_space<vmem>>, %arg3: memref<2x8xf32, #tpu.memory_space<vmem>>) attributes {dimension_semantics = [#tpu.dimension_semantics<parallel>], iteration_bounds = array<i64: 1>, scalar_prefetch = 0 : i64, scratch_operands = 0 : i64, tpu.core_type = #tpu.core_type<tc>, window_params = [{transform_indices = @transform_0, window_bounds = array<i64: 2, 32>}, {transform_indices = @transform_1, window_bounds = array<i64: 2, 8, 32>}, {transform_indices = @transform_2, window_bounds = array<i64: 2, 8>}]} {
    %c0 = arith.constant 0 : index
    %c0_0 = arith.constant 0 : index
    %0 = vector.load %arg1[%c0, %c0_0] : memref<2x32xf32, #tpu.memory_space<vmem>>, vector<2x32xf32>
    %c0_1 = arith.constant 0 : index
    %c0_2 = arith.constant 0 : index
    %c0_3 = arith.constant 0 : index
    %1 = vector.load %arg2[%c0_1, %c0_2, %c0_3] : memref<2x8x32xf32, #tpu.memory_space<vmem>>, vector<2x8x32xf32>
    %2 = vector.shape_cast %0 : vector<2x32xf32> to vector<2x1x32xf32>
    %3 = vector.broadcast %2 : vector<2x1x32xf32> to vector<2x8x32xf32>
    %4 = arith.mulf %1, %3 : vector<2x8x32xf32>
    %cst = arith.constant dense<0.000000e+00> : vector<2x8xf32>
    %5 = vector.multi_reduction <add>, %4, %cst [2] : vector<2x8x32xf32> to vector<2x8xf32>
    %cst_4 = arith.constant dense<0xFF800000> : vector<2xf32>
    %6 = vector.multi_reduction <maximumf>, %5, %cst_4 [1] : vector<2x8xf32> to vector<2xf32>
    %7 = vector.shape_cast %6 : vector<2xf32> to vector<2x1xf32>
    %8 = vector.broadcast %7 : vector<2x1xf32> to vector<2x8xf32>
    %9 = arith.subf %5, %8 : vector<2x8xf32>
    %10 = math.exp %9 : vector<2x8xf32>
    %cst_5 = arith.constant dense<0.000000e+00> : vector<2xf32>
    %11 = vector.multi_reduction <add>, %10, %cst_5 [1] : vector<2x8xf32> to vector<2xf32>
    %12 = vector.shape_cast %11 : vector<2xf32> to vector<2x1xf32>
    %cst_6 = arith.constant 1.000000e+00 : f32
    %13 = vector.broadcast %cst_6 : f32 to vector<2x1xf32>
    %14 = arith.divf %13, %12 : vector<2x1xf32>
    %15 = vector.broadcast %14 : vector<2x1xf32> to vector<2x8xf32>
    %16 = arith.mulf %10, %15 : vector<2x8xf32>
    %c0_7 = arith.constant 0 : index
    %c0_8 = arith.constant 0 : index
    %17 = vector.load %arg3[%c0_7, %c0_8] : memref<2x8xf32, #tpu.memory_space<vmem>>, vector<2x8xf32>
    tpu.vector_store %arg3[%c0_7, %c0_8], %16 {strides = array<i32>} : memref<2x8xf32, #tpu.memory_space<vmem>>, vector<2x8xf32>,
    return
  }
  func.func @transform_0(%arg0: i32) -> (i32, i32) {
    %c0_i32 = arith.constant 0 : i32
    %c0_i32_0 = arith.constant 0 : i32
    return %arg0, %c0_i32 : i32, i32
  }
  func.func @transform_1(%arg0: i32) -> (i32, i32, i32) {
    %c0_i32 = arith.constant 0 : i32
    %c0_i32_0 = arith.constant 0 : i32
    %c0_i32_1 = arith.constant 0 : i32
    return %arg0, %c0_i32, %c0_i32_0 : i32, i32, i32
  }
  func.func @transform_2(%arg0: i32) -> (i32, i32) {
    %c0_i32 = arith.constant 0 : i32
    %c0_i32_0 = arith.constant 0 : i32
    return %arg0, %c0_i32 : i32, i32
  }
}

</mosaic_0001>

<llo_original>
// kernel: tpu_custom_call.1
$region0: #{tpu_custom_call.1}
  #allocation0 [shape = 'u32[]', space=smem, size = 0x4, offset = 0x4, fixed_abs, tag = 'smem constant byte address 0x4 - core index']
  #allocation1 [shape = 'u32[144,128]{1,0:T(1,128)}', space=vmem, size = 0x12000, scoped, tag = 'internal scratch']
  %s0 = inlined_call_operand.hbm [shape: f32[2,32], index: 0, kind: input, shape index: {}]
  %s1 = inlined_call_operand.hbm [shape: f32[2,8,32], index: 1, kind: input, shape index: {}]
  %s2 = inlined_call_operand.hbm [shape: f32[2,8], index: 2, kind: output, shape index: {}]
  %s3 = sld [smem:[#allocation0]]
  $region26: #{tpu_custom_call.1} parent=0
    _
  %s5 = ssub.s32 1, %s3
  %s6 = scalar_select 0, %s5, %s3
  $region1: #{tpu_custom_call.1} parent=0
    #allocation2 [shape = 'u8[1024]{0}', space=vmem, size = 0x400, scoped, tag = 'input window, operand 0, single buffered']
    #allocation3 [shape = 's32[1]{0}', space=sflag, size = 0x4, scoped, tag = 'scoped memory for tpu_custom_call.1']
    #allocation4 [shape = 's32[1]{0}', space=sflag, size = 0x4, scoped, tag = 'scoped memory for tpu_custom_call.1']
    #allocation5 [shape = 'u8[8192]{0}', space=vmem, size = 0x2000, scoped, tag = 'input window, operand 1, single buffered']
    #allocation6 [shape = 's32[1]{0}', space=sflag, size = 0x4, scoped, tag = 'scoped memory for tpu_custom_call.1']
    #allocation7 [shape = 'u8[1024]{0}', space=vmem, size = 0x400, scoped, tag = 'output window, operand 0, single buffered']
    %7 = vsyncpa [#allocation3], 0
    %8 = vsyncpa [#allocation6], 0
    %9 = vsyncpa [#allocation4], 0
    // Predicated region
    $region2: #{tpu_custom_call.1} parent=1 // pred_check
      _
    $region3: #{tpu_custom_call.1} parent=1 // pred_check_branch
      %11 = sbr.rel (0) target = $region5
    $region4: #{tpu_custom_call.1} parent=1 // pred_region
      %s13 = ssub.s32 32, 32
      %14 = vsyncadd [#allocation3], %s13
      %s16 = sshll.u32 [#allocation2], 4
      %s17 = int_to_ptr.vmem [resolvable:$true] %s16
      %19 = dma.hbm_to_vmem [thread:$0]  %s0, 32, %s17, [#allocation3]
    $region5: #{tpu_custom_call.1} parent=1 // pred_fallthru
      _
    // Predicated region
    $region6: #{tpu_custom_call.1} parent=1 // pred_check
      _
    $region7: #{tpu_custom_call.1} parent=1 // pred_check_branch
      %21 = sbr.rel (0) target = $region9
    $region8: #{tpu_custom_call.1} parent=1 // pred_region
      %s23 = ssub.s32 256, 256
      %24 = vsyncadd [#allocation6], %s23
      %s25 = sshll.u32 [#allocation5], 4
      %s26 = int_to_ptr.vmem [resolvable:$true] %s25
      %31 = dma.hbm_to_vmem [thread:$0]  %s1, 256, %s26, [#allocation6], 128, 128, 8
    $region9: #{tpu_custom_call.1} parent=1 // pred_fallthru
      _
    // Predicated region
    $region10: #{tpu_custom_call.1} parent=1 // pred_check
      _
    $region11: #{tpu_custom_call.1} parent=1 // pred_check_branch
      %33 = sbr.rel (0) target = $region13
    $region12: #{tpu_custom_call.1} parent=1 // pred_region
      %34 = dma.done [#allocation3], 32
    $region13: #{tpu_custom_call.1} parent=1 // pred_fallthru
      _
    // Predicated region
    $region14: #{tpu_custom_call.1} parent=1 // pred_check
      _
    $region15: #{tpu_custom_call.1} parent=1 // pred_check_branch
      %36 = sbr.rel (0) target = $region17
    $region16: #{tpu_custom_call.1} parent=1 // pred_region
      %37 = dma.done [#allocation6], 256
    $region17: #{tpu_custom_call.1} parent=1 // pred_fallthru
      _
    %v38 = vld [vmem:[#allocation2] sm:$0x3]
    %v39 = vld [vmem:[#allocation5] sm:$0xff]
    %v40 = vld [vmem:[#allocation5 + $0x8] sm:$0xff]
    %v43 = vunpack.c.l.s4 1966171168
    %v44 = vunpack.c.0.s8 %v43
    %v45 = vlaneseq
    %v46 = vshrl.u32 %v45, 7
    %v47 = vsub.s32 %v44, %v46
    %v48 = vrot.slane %v38, %v47
    %v49 = vcombine.high %v48, %v48
    %v51 = vunpack.c.l.s4 1966171168
    %v52 = vunpack.c.0.s8 %v51
    %v53 = vlaneseq
    %v54 = vshrl.u32 %v53, 7
    %v55 = vsub.s32 %v52, %v54
    %v56 = vrot.slane %v48, %v55
    %v58 = vunpack.c.l.s4 1966171168
    %v59 = vunpack.c.0.s8 %v58
    %v60 = vlaneseq
    %v61 = vshrl.u32 %v60, 7
    %v62 = vsub.s32 %v59, %v61
    %v63 = vrot.slane %v49, %v62
    %v64 = vlaneseq
    %v65 = vshrl.u32 %v64, 7
    %v66 = vsub.s32 0, %v65
    %v67 = vrot.slane %v56, %v66
    %v68 = vlaneseq
    %v69 = vshrl.u32 %v68, 7
    %v70 = vsub.s32 0, %v69
    %v71 = vrot.slane %v63, %v70
    %v74 = vmul.f32 %v39, %v67
    %v75 = vmul.f32 %v40, %v71
    %vm76 = vcmask 261120
    %v77 = vsel %vm76, %v74, 0.0
    %78 = vadd.xlane.f32.xlu0 %v77
    %v79 = vpop.xlane.xlu0 %78
    %v80 = vsel %vm76, %v75, 0.0
    %81 = vadd.xlane.f32.xlu0 %v80
    %v82 = vpop.xlane.xlu0 %81
    %v85 = vlaneseq
    %v86 = vand.u32 %v85, 127
    %v87 = vlaneseq
    %v88 = vshrl.u32 %v87, 7
    %v89 = vsub.s32 %v86, %v88
    %v90 = vrot.slane %v79, %v89
    %v91 = vlaneseq
    %v92 = vshrl.u32 %v91, 7
    %v93 = vsub.s32 %v86, %v92
    %v94 = vrot.slane %v82, %v93
    %vm95 = vcmask 1041409
    %v96 = vsel %vm95, %v94, %v90
    %vm98 = vcmask 58368
    %v99 = vsel %vm98, %v96, -inf
    %100 = vmax.xlane.f32.xlu0 %v99
    %v101 = vpop.xlane.xlu0 %100
    %v103 = vlaneseq
    %v104 = vshrl.u32 %v103, 7
    %v105 = vsub.s32 0, %v104
    %v106 = vrot.slane %v101, %v105
    %v107 = vlaneseq
    %v108 = vshrl.u32 %v107, 7
    %v109 = vsub.s32 1, %v108
    %v110 = vrot.slane %v101, %v109
    %v113 = vsub.f32 %v79, %v106
    %v114 = vsub.f32 %v82, %v110
    %v115 = vmul.f32 %v113, 1.442695
    %v116 = vpow.pop %v115
    %v117 = vmul.f32 %v114, 1.442695
    %v118 = vpow.pop %v117
    %121 = vset.pattern.permute.xlu0 0
    %122 = vperm.xlu0 %121, %v116
    %v123 = vpop.permute.xlu0 %122
    %124 = vset.pattern.permute.xlu0 0
    %125 = vperm.xlu0 %124, %v118
    %v126 = vpop.permute.xlu0 %125
    %v127 = vlaneseq
    %v128 = vshrl.u32 %v127, 7
    %v129 = vsub.s32 %v86, %v128
    %v130 = vrot.slane %v123, %v129
    %v131 = vlaneseq
    %v132 = vshrl.u32 %v131, 7
    %v133 = vsub.s32 %v86, %v132
    %v134 = vrot.slane %v126, %v133
    %v135 = vsel %vm95, %v134, %v130
    %v137 = vsel %vm98, %v135, 0.0
    %138 = vadd.xlane.f32.xlu0 %v137
    %v139 = vpop.xlane.xlu0 %138
    %v140 = vrcp.pop %v139
    %v141 = vmul.f32 1.0, %v140
    %v143 = vlaneseq
    %v144 = vshrl.u32 %v143, 7
    %v145 = vsub.s32 0, %v144
    %v146 = vrot.slane %v141, %v145
    %v147 = vlaneseq
    %v148 = vshrl.u32 %v147, 7
    %v149 = vsub.s32 1, %v148
    %v150 = vrot.slane %v141, %v149
    %v153 = vmul.f32 %v116, %v146
    %v154 = vmul.f32 %v118, %v150
    %157 = vset.pattern.permute.xlu0 0
    %158 = vperm.xlu0 %157, %v153
    %v159 = vpop.permute.xlu0 %158
    %160 = vset.pattern.permute.xlu0 0
    %161 = vperm.xlu0 %160, %v154
    %v162 = vpop.permute.xlu0 %161
    %v163 = vlaneseq
    %v164 = vshrl.u32 %v163, 7
    %v165 = vsub.s32 %v86, %v164
    %v166 = vrot.slane %v159, %v165
    %v167 = vlaneseq
    %v168 = vshrl.u32 %v167, 7
    %v169 = vsub.s32 %v86, %v168
    %v170 = vrot.slane %v162, %v169
    %v171 = vsel %vm95, %v170, %v166
    %173 = vst.msk [vmem:[#allocation7] sm:$0x3] %vm98, %v171
    // Predicated region
    $region18: #{tpu_custom_call.1} parent=1 // pred_check
      _
    $region19: #{tpu_custom_call.1} parent=1 // pred_check_branch
      %175 = sbr.rel (0) target = $region21
    $region20: #{tpu_custom_call.1} parent=1 // pred_region
      %s177 = ssub.s32 32, 32
      %178 = vsyncadd [#allocation4], %s177
      %s180 = sshll.u32 [#allocation7], 4
      %s181 = int_to_ptr.vmem [resolvable:$true] %s180
      %183 = dma.vmem_to_hbm [thread:$0]  %s181, 32, %s2, [#allocation4]
    $region21: #{tpu_custom_call.1} parent=1 // pred_fallthru
      _
    // Predicated region
    $region22: #{tpu_custom_call.1} parent=1 // pred_check
      _
    $region23: #{tpu_custom_call.1} parent=1 // pred_check_branch
      %185 = sbr.rel (0) target = $region25
    $region24: #{tpu_custom_call.1} parent=1 // pred_region
      %186 = dma.done [#allocation4], 32
    $region25: #{tpu_custom_call.1} parent=1 // pred_fallthru
      _
    %187 = vsyncpa [#allocation3], 1
    %188 = vsyncpa [#allocation6], 1
    %189 = vsyncpa [#allocation4], 1

</llo_original>
